<compile_context>
chip_gen: v7x
topology: tpu7x:2x2x1
jax: 0.10.0
libtpu: 0.0.40
codegen_flags: <defaults>
</compile_context>

<pallas_src>
import numpy as np
import jax
import jax.numpy as jnp
from jax import lax
from jax.experimental import pallas as pl
from jax.experimental.pallas import tpu as pltpu


def _round_up(x, m):
    return -(-x // m) * m


_MAX_TILE_DST = 512    # measured ~85% of HBM roofline at 512-row tiles
_MAX_TILE_SRC = 1024   # K-reduction tile (lane dim of A, sublane dim of XW)


def _tile_and_pad(n, max_tile, align):
    """Pick a tile (multiple of `align`, capped at max_tile) and pad n to a multiple of it."""
    tile = min(max_tile, _round_up(n, align))
    return tile, _round_up(n, tile)


def _compiler_params(dim_sems, live_bytes):
    # Explicit scoped-VMEM budget: above v5e's 16 MiB default, never above v7x's 64 MiB
    # physical.  live_bytes is a conservative (f32) estimate of double-buffered blocks.
    limit = int(min(64 * 1024 * 1024, max(32 * 1024 * 1024, live_bytes + (8 << 20))))
    return pltpu.CompilerParams(dimension_semantics=dim_sems, vmem_limit_bytes=limit)


# ---------------- fused A @ XW + 'sum' cross-type aggregation ----------------------------
def _gc_sum_kernel(a_ref, xw_ref, b_ref, o_ref, acc_ref):
    rel, src = pl.program_id(1), pl.program_id(2)

    @pl.when((rel == 0) & (src == 0))
    def _():
        acc_ref[...] = jnp.zeros_like(acc_ref)

    acc_ref[...] += jnp.dot(a_ref[...], xw_ref[...],
                            preferred_element_type=jnp.float32)

    @pl.when((rel == pl.num_programs(1) - 1) & (src == pl.num_programs(2) - 1))
    def _():
        o_ref[...] = acc_ref[...] + b_ref[...]      # folded bias: single final add


def fused_graphconv_sum(a_stack, xw_stack, b_stack, f_out, n_dst, tile_dst, tile_src):
    r, n_dst_pad, n_src_pad = a_stack.shape
    f_pad = xw_stack.shape[2]
    b_total = jnp.sum(b_stack, axis=0)              # [1, f_pad]; sum of per-relation biases
    live = 4 * (2 * tile_dst * tile_src + 2 * tile_src * f_pad
                + 3 * tile_dst * f_pad + 2 * f_pad)
    out = pl.pallas_call(
        _gc_sum_kernel,
        out_shape=jax.ShapeDtypeStruct((n_dst_pad, f_pad), jnp.float32),
        grid=(n_dst_pad // tile_dst, r, n_src_pad // tile_src),
        in_specs=[
            pl.BlockSpec((None, tile_dst, tile_src), lambda i, k, s: (k, i, s)),
            pl.BlockSpec((None, tile_src, f_pad), lambda i, k, s: (k, s, 0)),
            pl.BlockSpec((1, f_pad), lambda i, k, s: (0, 0)),
        ],
        out_specs=pl.BlockSpec((tile_dst, f_pad), lambda i, k, s: (i, 0)),
        scratch_shapes=[pltpu.VMEM((tile_dst, f_pad), jnp.float32)],
        compiler_params=_compiler_params(("parallel", "arbitrary", "arbitrary"), live),
    )(a_stack, xw_stack, b_total)
    return out[:n_dst, :f_out]


# ---------------- per-relation GraphConv (stage 1 of the 'depth' aggregation) -------------
def _gc_rel_kernel(a_ref, xw_ref, b_ref, y_ref, acc_ref):
    src = pl.program_id(2)

    @pl.when(src == 0)
    def _():
        acc_ref[...] = jnp.zeros_like(acc_ref)

    acc_ref[...] += jnp.dot(a_ref[...], xw_ref[...],
                            preferred_element_type=jnp.float32)

    @pl.when(src == pl.num_programs(2) - 1)
    def _():
        y_ref[0] = acc_ref[...] + b_ref[...]


def _graphconv_per_relation(a_stack, xw_stack, b_stack, tile_dst, tile_src):
    r, n_dst_pad, n_src_pad = a_stack.shape
    f_pad = xw_stack.shape[2]
    live = 4 * (2 * tile_dst * tile_src + 2 * tile_src * f_pad
                + 3 * tile_dst * f_pad + 2 * f_pad)
    return pl.pallas_call(
        _gc_rel_kernel,
        out_shape=jax.ShapeDtypeStruct((r, n_dst_pad, f_pad), jnp.float32),
        grid=(n_dst_pad // tile_dst, r, n_src_pad // tile_src),
        in_specs=[
            pl.BlockSpec((None, tile_dst, tile_src), lambda i, k, s: (k, i, s)),
            pl.BlockSpec((None, tile_src, f_pad), lambda i, k, s: (k, s, 0)),
            pl.BlockSpec((None, 1, f_pad), lambda i, k, s: (k, 0, 0)),
        ],
        out_specs=pl.BlockSpec((1, tile_dst, f_pad), lambda i, k, s: (k, i, 0)),
        scratch_shapes=[pltpu.VMEM((tile_dst, f_pad), jnp.float32)],
        compiler_params=_compiler_params(("parallel", "arbitrary", "arbitrary"), live),
    )(a_stack, xw_stack, b_stack)


# ---------------- fused Conv2d stack stencil (stage 2 of the 'depth' aggregation) ---------
def _depth_stencil_kernel(w_ref, yp_ref, yc_ref, yn_ref, o_ref):
    f = o_ref.shape[-1]
    # hoist all SMEM scalar reads out of the unrolled loops
    w = [w_ref[i] for i in range(18)]        # 1x1-conv-folded grouped 3x3 weights [2,3,3]
    bias = w_ref[18]                         # w1 . b3 + b1
    s = [None, None, None]                   # one VPU accumulator per lane tap (dj-1,0,+1)
    for c in range(2):
        rows = (yp_ref[c], yc_ref[c], yn_ref[c])   # node-axis taps: in[n-1], in[n], in[n+1]
        for di in range(3):
            r = rows[di]
            for dj in range(3):
                t = r * w[c * 9 + di * 3 + dj]
                s[dj] = t if s[dj] is None else s[dj] + t
    # lane (feature-axis) taps: circular roll is exact zero padding because feature columns
    # >= F_OUT are zero and F_OUT < f_pad (wrapper always leaves >=1 padding lane panel).
    o_ref[...] = (s[1] + pltpu.roll(s[0], 1, axis=1)
                  + pltpu.roll(s[2], f - 1, axis=1) + bias)


def fused_graphconv_depth(a_stack, xw_stack, b_stack, depth_params, f_out, n_dst,
                          tile_dst, tile_src):
    r, n_dst_pad, _ = a_stack.shape
    assert r == 2, "the 'depth' Conv2d stack expects exactly 2 relation channels"
    f_pad = xw_stack.shape[2]
    assert f_out < f_pad, "depth mode needs at least one zero padding lane"

    # stage 1: per-relation GraphConv  Y[c] = A_c @ XW_c + b_c   -> [2, n_dst_pad, f_pad]
    y = _graphconv_per_relation(a_stack, xw_stack, b_stack, tile_dst, tile_src)

    # wrapper-side node-axis shifts with exact zero boundaries at rows 0 / n_dst-1:
    # the tiled stencil kernel then needs no halos, no sublane rolls, no edge masks.
    if n_dst < n_dst_pad:
        y = y.at[:, n_dst:].set(0.0)          # padded rows carry the bias; zero them
    y_prev = jnp.pad(y[:, :-1], ((0, 0), (1, 0), (0, 0)))   # in[n-1, :]
    y_next = jnp.pad(y[:, 1:], ((0, 0), (0, 1), (0, 0)))    # in[n+1, :]

    # fold Conv2d(2,1,1) into the grouped 3x3 weights:  w_eff[c] = w1[c]*w3[c],
    # bias_eff = w1 . b3 + b1  -> the final channel combine becomes a single add.
    w3, b3, w1, b1 = depth_params
    w_eff = jnp.concatenate([w3[:9] * w1[0], w3[9:] * w1[1],
                             (w1[0] * b3[0] + w1[1] * b3[1] + b1[0])[None]])

    live = 4 * (14 * tile_dst * f_pad)
    smem = pl.BlockSpec(memory_space=pltpu.MemorySpace.SMEM)
    out = pl.pallas_call(
        _depth_stencil_kernel,
        out_shape=jax.ShapeDtypeStruct((n_dst_pad, f_pad), jnp.float32),
        grid=(n_dst_pad // tile_dst,),
        in_specs=[
            smem,
            pl.BlockSpec((2, tile_dst, f_pad), lambda i: (0, i, 0)),
            pl.BlockSpec((2, tile_dst, f_pad), lambda i: (0, i, 0)),
            pl.BlockSpec((2, tile_dst, f_pad), lambda i: (0, i, 0)),
        ],
        out_specs=pl.BlockSpec((tile_dst, f_pad), lambda i: (i, 0)),
        compiler_params=_compiler_params(("parallel",), live),
    )(w_eff, y_prev, y, y_next)
    return out[:n_dst, :f_out]


# ---------------- batching of all relations targeting one dst type ------------------------
def _stack_relations(cets, adjs, inputs, rel_params, lane_halo, matmul_dtype=jnp.float32):
    """Stack + zero-pad all relations of one dst type; X@W is precomputed here (hoisted)."""
    f_out = rel_params[cets[0][1]][0].shape[1]
    # lane_halo: depth mode needs >=1 zero padding lane for the circular-roll stencil taps
    f_pad = _round_up(f_out + (1 if lane_halo else 0), 128)
    n_dst = adjs[cets[0]].shape[0]
    n_src_max = max(adjs[c].shape[1] for c in cets)
    tile_dst, n_dst_pad = _tile_and_pad(n_dst, _MAX_TILE_DST, 8)
    tile_src, n_src_pad = _tile_and_pad(n_src_max, _MAX_TILE_SRC, 128)

    a_l, xw_l, b_l = [], [], []
    for (stype, etype, dsttype) in cets:
        a = adjs[(stype, etype, dsttype)]
        x = inputs[stype]
        w, b = rel_params[etype]
        xw = jnp.dot(x, w)                               # hoisted: once per relation
        a_l.append(jnp.pad(a, ((0, n_dst_pad - a.shape[0]),
                               (0, n_src_pad - a.shape[1]))).astype(matmul_dtype))
        xw_l.append(jnp.pad(xw, ((0, n_src_pad - xw.shape[0]),
                                 (0, f_pad - xw.shape[1]))).astype(matmul_dtype))
        b_l.append(jnp.pad(b, ((0, 0), (0, f_pad - b.shape[1]))))
    return (jnp.stack(a_l), jnp.stack(xw_l), jnp.stack(b_l),
            f_out, n_dst, tile_dst, tile_src)


# ---------------- HeteroGraphConv.forward glue --------------------------------------------
def hetero_graph_conv_forward(canonical_etypes, adjs, inputs, rel_params,
                              depth_params, aggregate='sum', matmul_dtype=jnp.float32):
    by_dst = {}
    for cet in canonical_etypes:
        stype, _, dsttype = cet
        if stype not in inputs:
            continue
        by_dst.setdefault(dsttype, []).append(cet)

    rsts = {}
    for dsttype, cets in by_dst.items():
        use_depth = (aggregate == 'depth' and len(cets) > 1)
        a_s, xw_s, b_s, f_out, n_dst, t_dst, t_src = _stack_relations(
            cets, adjs, inputs, rel_params, lane_halo=use_depth, matmul_dtype=matmul_dtype)
        if aggregate == 'sum':
            rsts[dsttype] = fused_graphconv_sum(a_s, xw_s, b_s, f_out, n_dst, t_dst, t_src)
        elif aggregate == 'depth':
            if not use_depth:
                # matches torch _depth_agg_func: a single relation output is returned
                # unchanged (the Conv2d stack is skipped).
                rsts[dsttype] = fused_graphconv_sum(a_s, xw_s, b_s, f_out, n_dst,
                                                    t_dst, t_src)
            else:
                rsts[dsttype] = fused_graphconv_depth(a_s, xw_s, b_s, depth_params,
                                                      f_out, n_dst, t_dst, t_src)
        else:
            raise ValueError(f"unsupported aggregate {aggregate!r}")
    return rsts


# ---------------- plain-JAX references -----------------------------------------------------
def _ref_graphconv(a, x, w, b):
    return a @ (x @ w) + b


def _ref_depth(alist, w3, b3, w1, b1):
    x = jnp.stack(alist, 0)[None]                                    # [1, 2, N, F] NCHW
    y = lax.conv_general_dilated(x, w3.reshape(2, 1, 3, 3), (1, 1), 'SAME',
                                 dimension_numbers=('NCHW', 'OIHW', 'NCHW'),
                                 feature_group_count=2)
    y = y + b3.reshape(1, 2, 1, 1)
    z = lax.conv_general_dilated(y, w1.reshape(1, 2, 1, 1), (1, 1), 'SAME',
                                 dimension_numbers=('NCHW', 'OIHW', 'NCHW'))
    z = z + b1.reshape(1, 1, 1, 1)
    return z[0, 0]


if __name__ == "__main__":
    key = jax.random.PRNGKey(0)
    ks = jax.random.split(key, 12)

    N_USER, N_ITEM = 16, 16
    F_IN, F_OUT = 32, 64

    # node features per node type
    x_user = jax.random.normal(ks[0], (N_USER, F_IN), jnp.float32)
    x_item = jax.random.normal(ks[1], (N_ITEM, F_IN), jnp.float32)
    inputs = {'user': x_user, 'item': x_item}

    # two relations, both landing on dsttype 'user' (exercises cross-type aggregation)
    canonical_etypes = [('user', 'follows', 'user'), ('item', 'bought-by', 'user')]

    def make_adj(k, nd, ns):
        a = (jax.random.uniform(k, (nd, ns)) < 0.4).astype(jnp.float32)
        deg = jnp.maximum(a.sum(axis=1, keepdims=True), 1.0)
        return a / deg

    adjs = {
        ('user', 'follows', 'user'): make_adj(ks[2], N_USER, N_USER),
        ('item', 'bought-by', 'user'): make_adj(ks[3], N_USER, N_ITEM),
    }

    rel_params = {
        'follows': (jax.random.normal(ks[4], (F_IN, F_OUT), jnp.float32) * 0.1,
                    jax.random.normal(ks[5], (1, F_OUT), jnp.float32) * 0.1),
        'bought-by': (jax.random.normal(ks[6], (F_IN, F_OUT), jnp.float32) * 0.1,
                      jax.random.normal(ks[7], (1, F_OUT), jnp.float32) * 0.1),
    }

    # self.depth = Sequential(Conv2d(2,2,3,padding=1,groups=2), Conv2d(2,1,1))
    w3 = jax.random.normal(ks[8], (18,), jnp.float32) * 0.2    # weight [2,1,3,3] flattened
    b3 = jax.random.normal(ks[9], (2,), jnp.float32) * 0.1     # bias   [2]
    w1 = jax.random.normal(ks[10], (2,), jnp.float32) * 0.5    # weight [1,2,1,1] flattened
    b1 = jax.random.normal(ks[11], (1,), jnp.float32) * 0.1    # bias   [1]
    depth_params = (w3, b3, w1, b1)

    # Pallas implementation: default 'sum' aggregation and the 'depth' (Conv2d) aggregation
    out_sum = hetero_graph_conv_forward(canonical_etypes, adjs, inputs,
                                        rel_params, depth_params, aggregate='sum')
    out_depth = hetero_graph_conv_forward(canonical_etypes, adjs, inputs,
                                          rel_params, depth_params, aggregate='depth')
    jax.block_until_ready(out_sum)
    jax.block_until_ready(out_depth)

    # plain-JAX reference of the full forward
    rel_outs = [_ref_graphconv(adjs[cet], inputs[cet[0]], *rel_params[cet[1]])
                for cet in canonical_etypes]
    ref_sum = jnp.sum(jnp.stack(rel_outs, 0), axis=0)
    ref_depth = _ref_depth(rel_outs, w3, b3, w1, b1)

    np.testing.assert_allclose(np.asarray(out_sum['user']), np.asarray(ref_sum),
                               rtol=1e-5, atol=1e-5)
    np.testing.assert_allclose(np.asarray(out_depth['user']), np.asarray(ref_depth),
                               rtol=1e-5, atol=1e-5)
    assert 'item' not in out_sum and 'item' not in out_depth  # no relation targets 'item'
    print("KERNEL_OK")
</pallas_src>

<mosaic_0001>
module attributes {stable_mosaic.version = 11 : i64} {
  func.func @_gc_sum_kernel(%arg0: i32, %arg1: i32, %arg2: i32, %arg3: memref<1x16x128xf32, #tpu.memory_space<vmem>>, %arg4: memref<1x128x128xf32, #tpu.memory_space<vmem>>, %arg5: memref<1x128xf32, #tpu.memory_space<vmem>>, %arg6: memref<16x128xf32, #tpu.memory_space<vmem>>, %arg7: memref<16x128xf32, #tpu.memory_space<vmem>>) attributes {dimension_semantics = [#tpu.dimension_semantics<parallel>, #tpu.dimension_semantics<arbitrary>, #tpu.dimension_semantics<arbitrary>], iteration_bounds = array<i64: 1, 2, 1>, scalar_prefetch = 0 : i64, scratch_operands = 1 : i64, tpu.core_type = #tpu.core_type<tc>, window_params = [{transform_indices = @transform_0, window_bounds = array<i64: 1, 16, 128>}, {transform_indices = @transform_1, window_bounds = array<i64: 1, 128, 128>}, {pipeline_mode = #tpu.pipeline_mode<synchronous>, transform_indices = @transform_2, window_bounds = array<i64: 1, 128>}, {transform_indices = @transform_3, window_bounds = array<i64: 16, 128>}]} {
    %c0_i32 = arith.constant 0 : i32
    %0 = arith.cmpi eq, %arg1, %c0_i32 : i32
    %c0_i32_0 = arith.constant 0 : i32
    %1 = arith.cmpi eq, %arg2, %c0_i32_0 : i32
    %2 = arith.andi %0, %1 : i1
    %3 = arith.extui %2 : i1 to i32
    %c0_i32_1 = arith.constant 0 : i32
    %4 = arith.cmpi ne, %3, %c0_i32_1 : i32
    scf.if %4 {
      %cst_13 = arith.constant 0.000000e+00 : f32
      %18 = vector.broadcast %cst_13 : f32 to vector<16x128xf32>
      %c0_14 = arith.constant 0 : index
      %c0_15 = arith.constant 0 : index
      %19 = vector.load %arg7[%c0_14, %c0_15] : memref<16x128xf32, #tpu.memory_space<vmem>>, vector<16x128xf32>
      tpu.vector_store %arg7[%c0_14, %c0_15], %18 {strides = array<i32>} : memref<16x128xf32, #tpu.memory_space<vmem>>, vector<16x128xf32>,
    } else {
    }
    %c0 = arith.constant 0 : index
    %c0_2 = arith.constant 0 : index
    %5 = vector.load %arg7[%c0, %c0_2] : memref<16x128xf32, #tpu.memory_space<vmem>>, vector<16x128xf32>
    %c0_3 = arith.constant 0 : index
    %c0_4 = arith.constant 0 : index
    %c0_5 = arith.constant 0 : index
    %6 = vector.load %arg3[%c0_3, %c0_4, %c0_5] : memref<1x16x128xf32, #tpu.memory_space<vmem>>, vector<1x16x128xf32>
    %7 = vector.shape_cast %6 : vector<1x16x128xf32> to vector<16x128xf32>
    %c0_6 = arith.constant 0 : index
    %c0_7 = arith.constant 0 : index
    %c0_8 = arith.constant 0 : index
    %8 = vector.load %arg4[%c0_6, %c0_7, %c0_8] : memref<1x128x128xf32, #tpu.memory_space<vmem>>, vector<1x128x128xf32>
    %9 = vector.shape_cast %8 : vector<1x128x128xf32> to vector<128x128xf32>
    %cst = arith.constant dense<0.000000e+00> : vector<16x128xf32>
    %10 = tpu.matmul %7, %9, %cst {dimension_numbers = #tpu.dot_dimension_numbers<[1], [0], [0], [1], [0, 0, 1, 1], [], []>} : vector<16x128xf32>, vector<128x128xf32>, vector<16x128xf32> -> vector<16x128xf32>
    %11 = arith.addf %5, %10 : vector<16x128xf32>
    %c0_9 = arith.constant 0 : index
    %c0_10 = arith.constant 0 : index
    %12 = vector.load %arg7[%c0_9, %c0_10] : memref<16x128xf32, #tpu.memory_space<vmem>>, vector<16x128xf32>
    tpu.vector_store %arg7[%c0_9, %c0_10], %11 {strides = array<i32>} : memref<16x128xf32, #tpu.memory_space<vmem>>, vector<16x128xf32>,
    %c1_i32 = arith.constant 1 : i32
    %13 = arith.cmpi eq, %arg1, %c1_i32 : i32
    %c0_i32_11 = arith.constant 0 : i32
    %14 = arith.cmpi eq, %arg2, %c0_i32_11 : i32
    %15 = arith.andi %13, %14 : i1
    %16 = arith.extui %15 : i1 to i32
    %c0_i32_12 = arith.constant 0 : i32
    %17 = arith.cmpi ne, %16, %c0_i32_12 : i32
    scf.if %17 {
      %c0_13 = arith.constant 0 : index
      %c0_14 = arith.constant 0 : index
      %18 = vector.load %arg7[%c0_13, %c0_14] : memref<16x128xf32, #tpu.memory_space<vmem>>, vector<16x128xf32>
      %c0_15 = arith.constant 0 : index
      %c0_16 = arith.constant 0 : index
      %19 = vector.load %arg5[%c0_15, %c0_16] : memref<1x128xf32, #tpu.memory_space<vmem>>, vector<1x128xf32>
      %20 = vector.broadcast %19 : vector<1x128xf32> to vector<16x128xf32>
      %21 = arith.addf %18, %20 : vector<16x128xf32>
      %c0_17 = arith.constant 0 : index
      %c0_18 = arith.constant 0 : index
      %22 = vector.load %arg6[%c0_17, %c0_18] : memref<16x128xf32, #tpu.memory_space<vmem>>, vector<16x128xf32>
      tpu.vector_store %arg6[%c0_17, %c0_18], %21 {strides = array<i32>} : memref<16x128xf32, #tpu.memory_space<vmem>>, vector<16x128xf32>,
    } else {
    }
    return
  }
  func.func @transform_0(%arg0: i32, %arg1: i32, %arg2: i32) -> (i32, i32, i32) {
    %c0_i32 = arith.constant 0 : i32
    return %arg1, %arg0, %arg2 : i32, i32, i32
  }
  func.func @transform_1(%arg0: i32, %arg1: i32, %arg2: i32) -> (i32, i32, i32) {
    %c0_i32 = arith.constant 0 : i32
    %c0_i32_0 = arith.constant 0 : i32
    return %arg1, %arg2, %c0_i32 : i32, i32, i32
  }
  func.func @transform_2(%arg0: i32, %arg1: i32, %arg2: i32) -> (i32, i32) {
    %c0_i32 = arith.constant 0 : i32
    %c0_i32_0 = arith.constant 0 : i32
    %c0_i32_1 = arith.constant 0 : i32
    return %c0_i32, %c0_i32_0 : i32, i32
  }
  func.func @transform_3(%arg0: i32, %arg1: i32, %arg2: i32) -> (i32, i32) {
    %c0_i32 = arith.constant 0 : i32
    %c0_i32_0 = arith.constant 0 : i32
    return %arg0, %c0_i32 : i32, i32
  }
}

</mosaic_0001>

<llo_original>
// kernel: tpu_custom_call.1
$region0: #{tpu_custom_call.1}
  #allocation0 [shape = 'u32[]', space=smem, size = 0x4, offset = 0x4, fixed_abs, tag = 'smem constant byte address 0x4 - core index']
  #allocation1 [shape = 'u32[144,128]{1,0:T(1,128)}', space=vmem, size = 0x12000, scoped, tag = 'internal scratch']
  #allocation2 [shape = 'f32[16,128]{1,0:T(8,128)}', space=vmem, size = 0x2000, scoped, tag = 'scratch operand']
  %s0 = inlined_call_operand.hbm [shape: f32[2,16,128], index: 0, kind: input, shape index: {}]
  %s1 = inlined_call_operand.hbm [shape: f32[2,128,128], index: 1, kind: input, shape index: {}]
  %s2 = inlined_call_operand.vmem [shape: f32[1,128], index: 2, kind: input, shape index: {}]
  %s3 = inlined_call_operand.hbm [shape: f32[16,128], index: 3, kind: output, shape index: {}]
  %s4 = sld [smem:[#allocation0]]
  $region61: #{tpu_custom_call.1} parent=0
    _
  %s6 = ssub.s32 1, %s4
  %s7 = scalar_select 0, %s6, %s4
  $region1: #{tpu_custom_call.1} parent=0
    #allocation3 [shape = 'u8[16384]{0}', space=vmem, size = 0x4000, scoped, tag = 'input window, operand 0']
    #allocation4 [shape = 's32[2]{0}', space=sflag, size = 0x8, scoped, tag = 'scoped memory for tpu_custom_call.1']
    #allocation5 [shape = 's32[2]{0}', space=sflag, size = 0x8, scoped, tag = 'scoped memory for tpu_custom_call.1']
    #allocation6 [shape = 'u8[131072]{0}', space=vmem, size = 0x20000, scoped, tag = 'input window, operand 1']
    #allocation7 [shape = 's32[2]{0}', space=sflag, size = 0x8, scoped, tag = 'scoped memory for tpu_custom_call.1']
    #allocation8 [shape = 'u8[8192]{0}', space=vmem, size = 0x2000, scoped, tag = 'output window, operand 0, single buffered']
    %8 = vsyncpa [#allocation4], 0
    %s9 = scalar_lea.sflag [#allocation4], 1
    %10 = vsyncpa %s9, 0
    %11 = vsyncpa [#allocation7], 0
    %s12 = scalar_lea.sflag [#allocation7], 1
    %13 = vsyncpa %s12, 0
    %14 = vsyncpa [#allocation5], 0
    loop: start=0, step=1, limit=4
    $region2: #{tpu_custom_call.1} parent=1 // loop_pre_header
      _
    $region3: #{tpu_custom_call.1} parent=1 // loop_header
      %s16 = sphi 0, %s20
      %p17 = scmp.ge.s32.totalorder %s16, 4
      %s23 = sphi 0, %s42
      %s24 = sphi 0, %s38
      %s25 = sphi 0, %s34
      %s26 = sphi 0, %s23
      %s27 = sphi 0, %s24
      %s28 = sphi 0, %s25
      %s29 = sphi 0, %s26
      %s30 = sphi 0, %s27
      %s31 = sphi 0, %s28
      %s49 = sphi 0, %s51
      %s52 = sphi 0, %s49
      %s53 = sphi 0, %s52
      %s69 = sphi 0, %s53
      %s77 = sphi 0, %s79
      %s80 = sphi 0, %s77
      %s81 = sphi 0, %s80
      %s97 = sphi 0, %s81
      %s101 = sphi 0, %s101
      %s103 = sphi 0, %s101
      %s104 = sphi 0, %s103
      %s118 = sphi 0, %s104
      %s124 = sphi 0, %s126
      %s127 = sphi 0, %s124
      %s128 = sphi 0, %s127
      %s144 = sphi 0, %s128
    $region4: #{tpu_custom_call.1} parent=1 // loop_header_branch
      %19 = sbr.rel (%p17) target = $region8
    $region5: #{tpu_custom_call.1} parent=1 // loop_body
      %s21 = ssub.s32 %s16, 1
      %s22 = ssub.s32 %s16, 2
      %s32 = sadd.s32 1, %s25
      %p33 = scmp.ge.s32.totalorder %s32, 1
      %s34 = scalar_select %p33, 0, %s32
      %s35 = sadd.s32 1, %s24
      %s36 = scalar_select %p33, %s35, %s24
      %p37 = scmp.ge.s32.totalorder %s36, 2
      %s38 = scalar_select %p37, 0, %s36
      %s39 = sadd.s32 1, %s23
      %s40 = scalar_select %p37, %s39, %s23
      %p41 = scmp.ge.s32.totalorder %s40, 1
      %s42 = scalar_select %p41, 0, %s40
      %s43 = ssub.s32 %s24, %s38
      %s44 = ssub.s32 %s23, %s42
      %s45 = sor.u32 %s43, %s44
      %s46 = ssub.s32 %s25, %s34
      %s47 = sor.u32 %s45, %s46
      %p48 = scmp.eq.s32.totalorder %s47, 0
      %s50 = sadd.s32 %s49, 1
      %s51 = scalar_select %p48, %s49, %s50
      %p54 = pneg %p48
      %p55 = scmp.eq.s32.totalorder %s16, 1
      %p56 = por %p54, %p55
      %p57 = scmp.ne.s32.totalorder %s49, %s52
      %p58 = scmp.eq.s32.totalorder %s16, 0
      %p59 = por %p57, %p58
      %p60 = scmp.ne.s32.totalorder %s49, %s52
      %p61 = scmp.eq.s32.totalorder %s21, 1
      %p62 = por %p60, %p61
      %p63 = scmp.ne.s32.totalorder %s52, %s53
      %p64 = scmp.eq.s32.totalorder %s21, 0
      %p65 = por %p63, %p64
      %p66 = scmp.ne.s32.totalorder %s52, %s53
      %p67 = scmp.eq.s32.totalorder %s22, 1
      %p68 = por %p66, %p67
      %p70 = scmp.ne.s32.totalorder %s53, %s69
      %p71 = scmp.eq.s32.totalorder %s22, 0
      %p72 = por %p70, %p71
      %s73 = ssub.s32 %s24, %s38
      %s74 = ssub.s32 %s25, %s34
      %s75 = sor.u32 %s73, %s74
      %p76 = scmp.eq.s32.totalorder %s75, 0
      %s78 = sadd.s32 %s77, 1
      %s79 = scalar_select %p76, %s77, %s78
      %p82 = pneg %p76
      %p83 = scmp.eq.s32.totalorder %s16, 1
      %p84 = por %p82, %p83
      %p85 = scmp.ne.s32.totalorder %s77, %s80
      %p86 = scmp.eq.s32.totalorder %s16, 0
      %p87 = por %p85, %p86
      %p88 = scmp.ne.s32.totalorder %s77, %s80
      %p89 = scmp.eq.s32.totalorder %s21, 1
      %p90 = por %p88, %p89
      %p91 = scmp.ne.s32.totalorder %s80, %s81
      %p92 = scmp.eq.s32.totalorder %s21, 0
      %p93 = por %p91, %p92
      %p94 = scmp.ne.s32.totalorder %s80, %s81
      %p95 = scmp.eq.s32.totalorder %s22, 1
      %p96 = por %p94, %p95
      %p98 = scmp.ne.s32.totalorder %s81, %s97
      %p99 = scmp.eq.s32.totalorder %s22, 0
      %p100 = por %p98, %p99
      %s102 = sadd.s32 %s101, 1
      %p105 = scmp.eq.s32.totalorder %s16, 1
      %p106 = scmp.ne.s32.totalorder %s101, %s103
      %p107 = scmp.eq.s32.totalorder %s16, 0
      %p108 = por %p106, %p107
      %p109 = scmp.ne.s32.totalorder %s101, %s103
      %p110 = scmp.eq.s32.totalorder %s21, 1
      %p111 = por %p109, %p110
      %p112 = scmp.ne.s32.totalorder %s103, %s104
      %p113 = scmp.eq.s32.totalorder %s21, 0
      %p114 = por %p112, %p113
      %p115 = scmp.ne.s32.totalorder %s103, %s104
      %p116 = scmp.eq.s32.totalorder %s22, 1
      %p117 = por %p115, %p116
      %p119 = scmp.ne.s32.totalorder %s104, %s118
      %p120 = scmp.eq.s32.totalorder %s22, 0
      %p121 = por %p119, %p120
      %s122 = ssub.s32 %s23, %s42
      %p123 = scmp.eq.s32.totalorder %s122, 0
      %s125 = sadd.s32 %s124, 1
      %s126 = scalar_select %p123, %s124, %s125
      %p129 = pneg %p123
      %p130 = scmp.eq.s32.totalorder %s16, 1
      %p131 = por %p129, %p130
      %p132 = scmp.ne.s32.totalorder %s124, %s127
      %p133 = scmp.eq.s32.totalorder %s16, 0
      %p134 = por %p132, %p133
      %p135 = scmp.ne.s32.totalorder %s124, %s127
      %p136 = scmp.eq.s32.totalorder %s21, 1
      %p137 = por %p135, %p136
      %p138 = scmp.ne.s32.totalorder %s127, %s128
      %p139 = scmp.eq.s32.totalorder %s21, 0
      %p140 = por %p138, %p139
      %p141 = scmp.ne.s32.totalorder %s127, %s128
      %p142 = scmp.eq.s32.totalorder %s22, 1
      %p143 = por %p141, %p142
      %p145 = scmp.ne.s32.totalorder %s128, %s144
      %p146 = scmp.eq.s32.totalorder %s22, 0
      %p147 = por %p145, %p146
      %p148 = scmp.le.s32.totalorder 1, %s16
      %p149 = scmp.lt.s32.totalorder %s16, 3
      %p150 = pnand %p148, %p149
      %p151 = pneg %p150
      // Predicated region
      $region9: #{tpu_custom_call.1} parent=5 // pred_check
        _
      $region10: #{tpu_custom_call.1} parent=5 // pred_check_branch
        %153 = sbr.rel (%p150) target = $region12
      $region11: #{tpu_custom_call.1} parent=5 // pred_region
        %s154 = ssub.s32 %s16, 1
        // Predicated region
        $region13: #{tpu_custom_call.1} parent=11 // pred_check
          %p155 = pneg %p114
        $region14: #{tpu_custom_call.1} parent=11 // pred_check_branch
          %157 = sbr.rel (%p155) target = $region16
        $region15: #{tpu_custom_call.1} parent=11 // pred_region
          _
        $region16: #{tpu_custom_call.1} parent=11 // pred_fallthru
          _
      $region12: #{tpu_custom_call.1} parent=5 // pred_fallthru
        _
      %p158 = scmp.lt.s32.totalorder %s16, 2
      // Predicated region
      $region17: #{tpu_custom_call.1} parent=5 // pred_check
        %p159 = pneg %p158
      $region18: #{tpu_custom_call.1} parent=5 // pred_check_branch
        %161 = sbr.rel (%p159) target = $region20
      $region19: #{tpu_custom_call.1} parent=5 // pred_region
        // Predicated region
        $region21: #{tpu_custom_call.1} parent=19 // pred_check
          %p162 = pneg %p59
        $region22: #{tpu_custom_call.1} parent=19 // pred_check_branch
          %164 = sbr.rel (%p162) target = $region24
        $region23: #{tpu_custom_call.1} parent=19 // pred_region
          %s165 = sand.u32 %s49, 1
          %s166 = scalar_lea.sflag [#allocation4], %s165
          %s167 = sand.u32 %s49, 1
          %s168 = smul.addr %s167, 16
          %s169 = scalar_lea.vmem [#allocation3], %s168
          %s170 = smul.u32 2, %s23
          %s172 = ssub.s32 256, 256
          %173 = vsyncadd %s166, %s172
          %s174 = sadd.s32 %s25, %s170
          %s175 = smul.addr %s24, 2
          %s176 = sadd.s32 %s174, %s175
          %s177 = smul.addr %s176, 128
          %s178 = scalar_lea.hbm %s0, %s177
          %s179 = sshll.u32 %s169, 4
          %s180 = int_to_ptr.vmem [resolvable:$true] %s179
          %185 = dma.hbm_to_vmem [thread:$0]  %s178, 256, %s180, %s166, 128, 128, 8
        $region24: #{tpu_custom_call.1} parent=19 // pred_fallthru
          _
        // Predicated region
        $region25: #{tpu_custom_call.1} parent=19 // pred_check
          %p186 = pneg %p87
        $region26: #{tpu_custom_call.1} parent=19 // pred_check_branch
          %188 = sbr.rel (%p186) target = $region28
        $region27: #{tpu_custom_call.1} parent=19 // pred_region
          %s189 = sand.u32 %s77, 1
          %s190 = scalar_lea.sflag [#allocation7], %s189
          %s191 = sand.u32 %s77, 1
          %s192 = smul.addr %s191, 128
          %s193 = scalar_lea.vmem [#allocation6], %s192
          %s194 = smul.u32 16, %s25
          %s196 = ssub.s32 2048, 2048
          %197 = vsyncadd %s190, %s196
          %s198 = smul.addr %s24, 16
          %s199 = sadd.s32 %s194, %s198
          %s200 = smul.addr %s199, 128
          %s201 = scalar_lea.hbm %s1, %s200
          %s202 = sshll.u32 %s193, 4
          %s203 = int_to_ptr.vmem [resolvable:$true] %s202
          %208 = dma.hbm_to_vmem [thread:$0]  %s201, 2048, %s203, %s190, 128, 128, 8
        $region28: #{tpu_custom_call.1} parent=19 // pred_fallthru
          _
      $region20: #{tpu_custom_call.1} parent=5 // pred_fallthru
        _
      %p209 = scmp.le.s32.totalorder 1, %s16
      %p210 = scmp.lt.s32.totalorder %s16, 3
      %p211 = pnand %p209, %p210
      %p212 = pneg %p211
      // Predicated region
      $region29: #{tpu_custom_call.1} parent=5 // pred_check
        _
      $region30: #{tpu_custom_call.1} parent=5 // pred_check_branch
        %214 = sbr.rel (%p211) target = $region32
      $region31: #{tpu_custom_call.1} parent=5 // pred_region
        %s215 = ssub.s32 %s16, 1
        %s216 = sand.u32 %s52, 1
        %s217 = scalar_lea.sflag [#allocation4], %s216
        %s218 = sand.u32 %s52, 1
        %s219 = smul.addr %s218, 16
        %s220 = scalar_lea.vmem [#allocation3], %s219
        // Predicated region
        $region33: #{tpu_custom_call.1} parent=31 // pred_check
          %p221 = pneg %p65
        $region34: #{tpu_custom_call.1} parent=31 // pred_check_branch
          %223 = sbr.rel (%p221) target = $region36
        $region35: #{tpu_custom_call.1} parent=31 // pred_region
          %224 = dma.done %s217, 256
        $region36: #{tpu_custom_call.1} parent=31 // pred_fallthru
          _
        %s225 = sand.u32 %s80, 1
        %s226 = scalar_lea.sflag [#allocation7], %s225
        %s227 = sand.u32 %s80, 1
        %s228 = smul.addr %s227, 128
        %s229 = scalar_lea.vmem [#allocation6], %s228
        // Predicated region
        $region37: #{tpu_custom_call.1} parent=31 // pred_check
          %p230 = pneg %p93
        $region38: #{tpu_custom_call.1} parent=31 // pred_check_branch
          %232 = sbr.rel (%p230) target = $region40
        $region39: #{tpu_custom_call.1} parent=31 // pred_region
          %233 = dma.done %s226, 2048
        $region40: #{tpu_custom_call.1} parent=31 // pred_fallthru
          _
        %s234 = sand.u32 %s52, 1
        %s235 = scalar_lea.sflag [#allocation4], %s234
        %s236 = sand.u32 %s52, 1
        %s237 = smul.addr %s236, 16
        %s238 = scalar_lea.vmem [#allocation3], %s237
        %p239 = pneg %p65
        %p240 = pneg %p62
        %s241 = sand.u32 %s80, 1
        %s242 = scalar_lea.sflag [#allocation7], %s241
        %s243 = sand.u32 %s80, 1
        %s244 = smul.addr %s243, 128
        %s245 = scalar_lea.vmem [#allocation6], %s244
        %p246 = pneg %p93
        %p247 = pneg %p90
        %p248 = pneg %p114
        %p249 = pneg %p111
        %p250 = pneg %p140
        %p251 = pneg %p137
        %s252 = smul.u32 2, %s26
        %s253 = smul.u32 16, %s28
        %s254 = smul.u32 2, %s26
        %p255 = scmp.eq.s32.totalorder %s27, 0
        %p256 = scmp.eq.s32.totalorder %s28, 0
        %p257 = pnand %p255, %p256
        %p258 = pneg %p257
        // Predicated region
        $region41: #{tpu_custom_call.1} parent=31 // pred_check
          _
        $region42: #{tpu_custom_call.1} parent=31 // pred_check_branch
          %260 = sbr.rel (%p257) target = $region44
        $region43: #{tpu_custom_call.1} parent=31 // pred_region
          %261 = vst [vmem:[#allocation2] sm:$0xff] 0.0
          %262 = vst [vmem:[#allocation2 + $0x8] sm:$0xff] 0.0
        $region44: #{tpu_custom_call.1} parent=31 // pred_fallthru
          _
        %v263 = vld [vmem:[#allocation2] sm:$0xff]
        %v264 = vld [vmem:[#allocation2 + $0x8] sm:$0xff]
        %v265 = vld [vmem:[%s220] sm:$0xff]
        %v266 = vld [vmem:[%s220 + $0x8] sm:$0xff]
        %v267 = vld [vmem:[%s229] sm:$0xff]
        %v268 = vld [vmem:[%s229 + $0x8] sm:$0xff]
        %v269 = vld [vmem:[%s229 + $0x10] sm:$0xff]
        %v270 = vld [vmem:[%s229 + $0x18] sm:$0xff]
        %v271 = vld [vmem:[%s229 + $0x20] sm:$0xff]
        %v272 = vld [vmem:[%s229 + $0x28] sm:$0xff]
        %v273 = vld [vmem:[%s229 + $0x30] sm:$0xff]
        %v274 = vld [vmem:[%s229 + $0x38] sm:$0xff]
        %v275 = vld [vmem:[%s229 + $0x40] sm:$0xff]
        %v276 = vld [vmem:[%s229 + $0x48] sm:$0xff]
        %v277 = vld [vmem:[%s229 + $0x50] sm:$0xff]
        %v278 = vld [vmem:[%s229 + $0x58] sm:$0xff]
        %v279 = vld [vmem:[%s229 + $0x60] sm:$0xff]
        %v280 = vld [vmem:[%s229 + $0x68] sm:$0xff]
        %v281 = vld [vmem:[%s229 + $0x70] sm:$0xff]
        %v282 = vld [vmem:[%s229 + $0x78] sm:$0xff]
        %283 = vmatprep.subr.mxu0 0.0
        %284 = vmatpush1.msra.mxu0 %v267
        %285 = vmatprep.subr.mxu0 0.0
        %286 = vmatpush1.msra.mxu0 %v268
        %287 = vmatprep.subr.mxu0 0.0
        %288 = vmatpush1.msra.mxu0 %v269
        %289 = vmatprep.subr.mxu0 0.0
        %290 = vmatpush1.msra.mxu0 %v270
        %291 = vmatprep.subr.mxu0 0.0
        %292 = vmatpush1.msra.mxu0 %v271
        %293 = vmatprep.subr.mxu0 0.0
        %294 = vmatpush1.msra.mxu0 %v272
        %295 = vmatprep.subr.mxu0 0.0
        %296 = vmatpush1.msra.mxu0 %v273
        %297 = vmatprep.subr.mxu0 0.0
        %298 = vmatpush1.msra.mxu0 %v274
        %299 = vmatprep.subr.mxu0 0.0
        %300 = vmatpush1.msra.mxu0 %v275
        %301 = vmatprep.subr.mxu0 0.0
        %302 = vmatpush1.msra.mxu0 %v276
        %303 = vmatprep.subr.mxu0 0.0
        %304 = vmatpush1.msra.mxu0 %v277
        %305 = vmatprep.subr.mxu0 0.0
        %306 = vmatpush1.msra.mxu0 %v278
        %307 = vmatprep.subr.mxu0 0.0
        %308 = vmatpush1.msra.mxu0 %v279
        %309 = vmatprep.subr.mxu0 0.0
        %310 = vmatpush1.msra.mxu0 %v280
        %311 = vmatprep.subr.mxu0 0.0
        %312 = vmatpush1.msra.mxu0 %v281
        %313 = vmatprep.subr.mxu0 0.0
        %314 = vmatpush1.msra.mxu0 %v282
        %315 = vmatprep.subr.mxu0 0.0
        %316 = vmatpush1.msra.mxu0 0.0
        %317 = vmatprep.subr.mxu0 0.0
        %318 = vmatpush1.msra.mxu0 0.0
        %319 = vmatprep.subr.mxu0 0.0
        %320 = vmatpush1.msra.mxu0 0.0
        %321 = vmatprep.subr.mxu0 0.0
        %322 = vmatpush1.msra.mxu0 0.0
        %323 = vmatprep.subr.mxu0 0.0
        %324 = vmatpush1.msra.mxu0 0.0
        %325 = vmatprep.subr.mxu0 0.0
        %326 = vmatpush1.msra.mxu0 0.0
        %327 = vmatprep.subr.mxu0 0.0
        %328 = vmatpush1.msra.mxu0 0.0
        %329 = vmatprep.subr.mxu0 0.0
        %330 = vmatpush1.msra.mxu0 0.0
        %331 = vmatprep.subr.mxu0 0.0
        %332 = vmatpush1.msra.mxu0 0.0
        %333 = vmatprep.subr.mxu0 0.0
        %334 = vmatpush1.msra.mxu0 0.0
        %335 = vmatprep.subr.mxu0 0.0
        %336 = vmatpush1.msra.mxu0 0.0
        %337 = vmatprep.subr.mxu0 0.0
        %338 = vmatpush1.msra.mxu0 0.0
        %339 = vmatprep.subr.mxu0 0.0
        %340 = vmatpush1.msra.mxu0 0.0
        %341 = vmatprep.subr.mxu0 0.0
        %342 = vmatpush1.msra.mxu0 0.0
        %343 = vmatprep.subr.mxu0 0.0
        %344 = vmatpush1.msra.mxu0 0.0
        %345 = vmatprep.subr.mxu0 0.0
        %346 = vmatpush1.msra.mxu0 0.0
        %347 = vmatprep.mubr.f32.mxu0 0.0
        %348 = vmatmul.mubr.f32.gmra.mrb[0].mxu0 %v265
        %v349 = vpop.f32.mrb[0].mxu0
        %v350 = vadd.f32 0.0, %v349
        %v351 = vpop.f32.mrb[0].mxu0
        %352 = vmatprep.mubr.f32.mxu0 0.0
        %353 = vmatmul.mubr.f32.gmra.mrb[0].mxu0 %v266
        %v354 = vpop.f32.mrb[0].mxu0
        %v355 = vadd.f32 0.0, %v354
        %v356 = vpop.f32.mrb[0].mxu0
        %357 = vdwg.mxu0
        %v358 = vadd.f32 %v263, %v350
        %v359 = vadd.f32 %v264, %v355
        %360 = vst [vmem:[#allocation2] sm:$0xff] %v358
        %361 = vst [vmem:[#allocation2 + $0x8] sm:$0xff] %v359
        %p362 = scmp.eq.s32.totalorder %s27, 1
        %p363 = pnand %p362, %p256
        %p364 = pneg %p363
        // Predicated region
        $region45: #{tpu_custom_call.1} parent=31 // pred_check
          _
        $region46: #{tpu_custom_call.1} parent=31 // pred_check_branch
          %366 = sbr.rel (%p363) target = $region48
        $region47: #{tpu_custom_call.1} parent=31 // pred_region
          %v367 = vld [vmem:[#allocation2] sm:$0xff]
          %v368 = vld [vmem:[#allocation2 + $0x8] sm:$0xff]
          %v369 = vld [vmem:[%s2] sm:$0x1]
          %v371 = vlaneseq
          %v372 = vshrl.u32 %v371, 7
          %v373 = vsub.s32 0, %v372
          %v374 = vrot.slane %v369, %v373
          %v376 = vadd.f32 %v367, %v374
          %v377 = vadd.f32 %v368, %v374
          %378 = vst [vmem:[#allocation8] sm:$0xff] %v376
          %379 = vst [vmem:[#allocation8 + $0x8] sm:$0xff] %v377
        $region48: #{tpu_custom_call.1} parent=31 // pred_fallthru
          _
        // Predicated region
        $region49: #{tpu_custom_call.1} parent=31 // pred_check
          %p380 = pneg %p137
        $region50: #{tpu_custom_call.1} parent=31 // pred_check_branch
          %382 = sbr.rel (%p380) target = $region52
        $region51: #{tpu_custom_call.1} parent=31 // pred_region
          %s383 = smul.u32 2, %s26
          %s385 = ssub.s32 256, 256
          %386 = vsyncadd [#allocation5], %s385
          %s387 = smul.addr %s383, 128
          %s388 = scalar_lea.hbm %s3, %s387
          %s389 = sshll.u32 [#allocation8], 4
          %s390 = int_to_ptr.vmem [resolvable:$true] %s389
          %395 = dma.vmem_to_hbm [thread:$0]  %s390, 256, %s388, [#allocation5], 128, 128, 8
        $region52: #{tpu_custom_call.1} parent=31 // pred_fallthru
          _
        // Predicated region
        $region53: #{tpu_custom_call.1} parent=31 // pred_check
          %p396 = pneg %p137
        $region54: #{tpu_custom_call.1} parent=31 // pred_check_branch
          %398 = sbr.rel (%p396) target = $region56
        $region55: #{tpu_custom_call.1} parent=31 // pred_region
          %399 = dma.done [#allocation5], 256
        $region56: #{tpu_custom_call.1} parent=31 // pred_fallthru
          _
      $region32: #{tpu_custom_call.1} parent=5 // pred_fallthru
        _
      %p400 = scmp.le.s32.totalorder 2, %s16
      // Predicated region
      $region57: #{tpu_custom_call.1} parent=5 // pred_check
        %p401 = pneg %p400
      $region58: #{tpu_custom_call.1} parent=5 // pred_check_branch
        %403 = sbr.rel (%p401) target = $region60
      $region59: #{tpu_custom_call.1} parent=5 // pred_region
        %s404 = ssub.s32 %s16, 2
      $region60: #{tpu_custom_call.1} parent=5 // pred_fallthru
        _
    $region6: #{tpu_custom_call.1} parent=1 // loop_footer
      %s20 = sadd.s32 1, %s16
    $region7: #{tpu_custom_call.1} parent=1 // loop_footer_branch
      %15 = sbr.rel target = $region3
    $region8: #{tpu_custom_call.1} parent=1 // loop_exit
      _
    %405 = vsyncpa [#allocation4], 1
    %s406 = scalar_lea.sflag [#allocation4], 1
    %407 = vsyncpa %s406, 1
    %408 = vsyncpa [#allocation7], 1
    %s409 = scalar_lea.sflag [#allocation7], 1
    %410 = vsyncpa %s409, 1
    %411 = vsyncpa [#allocation5], 1
    %s412 = scalar_lea.sflag [#allocation5], 1
    %413 = vsyncpa %s412, 1

</llo_original>
